<compile_context>
chip_gen: v7x
topology: tpu7x:2x2x1
jax: 0.10.0
libtpu: 0.0.40
codegen_flags: <defaults>
</compile_context>

<pallas_src>
import functools
import math

import jax
import jax.numpy as jnp
from jax.experimental import pallas as pl
from jax.experimental.pallas import tpu as pltpu


def _round_up(x, m):
    return (x + m - 1) // m * m


def _deconv_kernel(x_ref, w_ref, b_ref, o_ref, *, kh, block_rows, width):
    # x_ref: (block_rows*width, Cin_p)       compute dtype (bf16 / f32)
    # w_ref: (kh, Cin_p, kw*Cout_p)          compute dtype
    # b_ref: (1, kw*Cout_p)                  f32
    # o_ref: (block_rows, kh, width, kw*Cout_p)
    x = x_ref[...]
    bias = b_ref[...]
    kc = b_ref.shape[-1]
    for ki in range(kh):  # static unroll (kh == 2)
        acc = jnp.dot(x, w_ref[ki], preferred_element_type=jnp.float32)
        acc = acc + bias
        # width is sublane-tile aligned, so this split of the sublane axis is
        # layout-preserving (no relayout copy).
        o_ref[:, ki, :, :] = acc.reshape(block_rows, width, kc).astype(o_ref.dtype)


def down_right_shifted_deconv2d_nhwc(x_nhwc, v, g, b, *, filter_size=(2, 2),
                                     stride=(2, 2), block_rows=None,
                                     compute_dtype=jnp.bfloat16,
                                     out_dtype=None,
                                     vmem_budget_bytes=40 * (1 << 20)):
    """NHWC entry point (preferred: no layout transposes at all).

    x_nhwc: (N, H, W, Cin); v: (Cin, Cout, kh, kw); g: (Cin,1,1,1); b: (Cout,).
    Returns (N, kh*H, kw*W, Cout) in out_dtype (default: x dtype)."""
    assert tuple(stride) == tuple(filter_size), (
        "only the non-overlapping PixelCNN++ case (stride == filter_size) is supported")
    N, H, W, Cin = x_nhwc.shape
    kh, kw = filter_size
    Cout = v.shape[1]
    out_dtype = x_nhwc.dtype if out_dtype is None else out_dtype

    # ---- weight norm (dim=0 -> norm over dims (1,2,3)) in f32, then downcast ----
    v32 = v.astype(jnp.float32)
    g32 = g.astype(jnp.float32)
    vnorm = jnp.sqrt(jnp.sum(v32 * v32, axis=(1, 2, 3), keepdims=True))
    w = g32 * v32 / vnorm                                   # (Cin, Cout, kh, kw)

    # ---- lane-dense padded sizes ----
    cd_bytes = jnp.dtype(compute_dtype).itemsize
    od_bytes = jnp.dtype(out_dtype).itemsize
    Cin_p = _round_up(Cin, 128)                              # contraction / lane axis
    Cout_p = _round_up(Cout, 128 // math.gcd(kw, 128))       # so kw*Cout_p % 128 == 0
    KC = kw * Cout_p                                         # output lane axis
    sub = max(8, 32 // max(od_bytes, 1))                     # sublane tile of out dtype
    W_p = _round_up(W, sub)                                  # sublane alignment

    # ---- weights / bias in GEMM layout: w_mat[ki, ci, kj*Cout_p + co] ----
    w_t = jnp.transpose(w, (2, 0, 3, 1))                     # (kh, Cin, kw, Cout)
    w_t = jnp.pad(w_t, ((0, 0), (0, Cin_p - Cin), (0, 0), (0, Cout_p - Cout)))
    w_mat = w_t.reshape(kh, Cin_p, KC).astype(compute_dtype)
    b_pad = jnp.pad(b.astype(jnp.float32), (0, Cout_p - Cout))
    b_mat = jnp.tile(b_pad, (kw,)).reshape(1, KC)            # f32, added to f32 acc

    # ---- tile the (n, h) image-row axis; keep >= 2 grid steps for megacore ----
    R = N * H
    if block_rows is None:
        tr = max(1, 1024 // W_p)                 # ~1024 GEMM rows per block
        tr = min(tr, max(1, (R + 1) // 2))       # >= 2 grid steps when R >= 2
    else:
        tr = max(1, int(block_rows))

    def _live_bytes(t):                          # double-buffered VMEM footprint
        x_blk = t * W_p * Cin_p * cd_bytes
        o_blk = t * kh * W_p * KC * od_bytes
        w_res = kh * Cin_p * KC * cd_bytes + KC * 4
        return 2 * (x_blk + o_blk + w_res)

    while tr > 1 and _live_bytes(tr) > vmem_budget_bytes:
        tr //= 2
    R_p = _round_up(R, tr)
    grid = (R_p // tr,)
    tm = tr * W_p                                # GEMM rows per block

    # ---- pack x to (R_p*W_p, Cin_p) in compute dtype ----
    xp = x_nhwc
    if W_p != W:
        xp = jnp.pad(xp, ((0, 0), (0, 0), (0, W_p - W), (0, 0)))
    x2 = xp.reshape(R * W_p, Cin)
    if Cin_p != Cin or R_p != R:
        x2 = jnp.pad(x2, ((0, (R_p - R) * W_p), (0, Cin_p - Cin)))
    x2 = x2.astype(compute_dtype)

    flops = 2 * (R_p * W_p) * Cin_p * kh * KC
    bytes_accessed = (R_p * W_p * Cin_p * cd_bytes + kh * Cin_p * KC * cd_bytes
                      + KC * 4 + R_p * kh * W_p * KC * od_bytes)
    vmem_limit = int(min(max(_live_bytes(tr) + (8 << 20), 32 << 20), 48 << 20))

    kernel = functools.partial(_deconv_kernel, kh=kh, block_rows=tr, width=W_p)
    out_raw = pl.pallas_call(
        kernel,
        out_shape=jax.ShapeDtypeStruct((R_p, kh, W_p, KC), out_dtype),
        grid=grid,
        in_specs=[
            pl.BlockSpec((tm, Cin_p), lambda i: (i, 0)),
            pl.BlockSpec((kh, Cin_p, KC), lambda i: (0, 0, 0)),   # resident weights
            pl.BlockSpec((1, KC), lambda i: (0, 0)),              # resident bias
        ],
        out_specs=pl.BlockSpec((tr, kh, W_p, KC), lambda i: (i, 0, 0, 0)),
        compiler_params=pltpu.CompilerParams(
            dimension_semantics=("parallel",),
            vmem_limit_bytes=vmem_limit),
        cost_estimate=pl.CostEstimate(flops=flops, transcendentals=0,
                                      bytes_accessed=bytes_accessed),
    )(x2, w_mat, b_mat)

    # ---- un-pad; when no padding was needed this is reshape-only (no copies) ----
    out = out_raw
    if R_p != R:
        out = out[:R]
    if W_p != W:
        out = out[:, :, :W, :]
    out = out.reshape(N, H, kh, W, kw, Cout_p)
    if Cout_p != Cout:
        out = out[..., :Cout]
    return out.reshape(N, kh * H, kw * W, Cout)


def down_right_shifted_deconv2d(x_nchw, v, g, b, **kwargs):
    """PyTorch-layout wrapper: NCHW in, NCHW out.

    The two transposes here are layout glue for PyTorch parity only; JAX/NHWC
    pipelines should call down_right_shifted_deconv2d_nhwc directly and skip them."""
    x_nhwc = jnp.transpose(x_nchw, (0, 2, 3, 1))
    y = down_right_shifted_deconv2d_nhwc(x_nhwc, v, g, b, **kwargs)
    return jnp.transpose(y, (0, 3, 1, 2))


def _reference(x_nchw, v, g, b, filter_size=(2, 2)):
    """Pure-JAX f32 reference of the cropped ConvTranspose2d with weight norm."""
    N, Cin, H, W = x_nchw.shape
    kh, kw = filter_size
    Cout = v.shape[1]
    vnorm = jnp.sqrt(jnp.sum(v * v, axis=(1, 2, 3), keepdims=True))
    w = g * v / vnorm
    x_nhwc = jnp.transpose(x_nchw, (0, 2, 3, 1))
    out6 = jnp.einsum('nhwc,cdij->nhwijd', x_nhwc, w) + b
    return jnp.transpose(out6, (0, 5, 1, 3, 2, 4)).reshape(N, Cout, kh * H, kw * W)


if __name__ == "__main__":
    key = jax.random.PRNGKey(0)
    kx, kv, kb = jax.random.split(key, 3)

    N, Cin, Cout, H, W = 2, 4, 4, 16, 16
    kh, kw = 2, 2

    x = jax.random.normal(kx, (N, Cin, H, W), dtype=jnp.float32)
    # weight_norm init: g = ||v|| so the effective weight equals v at init.
    v = 0.05 * jax.random.normal(kv, (Cin, Cout, kh, kw), dtype=jnp.float32)
    g = jnp.sqrt(jnp.sum(v * v, axis=(1, 2, 3), keepdims=True))
    b = 0.1 * jax.random.normal(kb, (Cout,), dtype=jnp.float32)

    ref = _reference(x, v, g, b, filter_size=(kh, kw))

    # Default fast path: bf16 x/weights, f32 MXU accumulation, f32 output.
    out = down_right_shifted_deconv2d(x, v, g, b, filter_size=(kh, kw), stride=(kh, kw))
    out = jax.block_until_ready(out)
    assert out.shape == (N, Cout, kh * H, kw * W), out.shape
    assert jnp.allclose(out, ref, atol=2e-2, rtol=2e-2), \
        float(jnp.max(jnp.abs(out - ref)))

    # f32 compute path: tight numerical check of the GEMM + layout logic.
    out32 = down_right_shifted_deconv2d(x, v, g, b, filter_size=(kh, kw),
                                        stride=(kh, kw), compute_dtype=jnp.float32)
    out32 = jax.block_until_ready(out32)
    assert jnp.allclose(out32, ref, atol=1e-5, rtol=1e-5), \
        float(jnp.max(jnp.abs(out32 - ref)))

    print("KERNEL_OK")
</pallas_src>

<mosaic_0001>
module attributes {stable_mosaic.version = 11 : i64} {
  func.func @_deconv_kernel(%arg0: i32, %arg1: memref<256x128xbf16, #tpu.memory_space<vmem>>, %arg2: memref<2x128x128xbf16, #tpu.memory_space<vmem>>, %arg3: memref<1x128xf32, #tpu.memory_space<vmem>>, %arg4: memref<16x2x16x128xf32, #tpu.memory_space<vmem>>) attributes {dimension_semantics = [#tpu.dimension_semantics<parallel>], iteration_bounds = array<i64: 2>, scalar_prefetch = 0 : i64, scratch_operands = 0 : i64, tpu.core_type = #tpu.core_type<tc>, window_params = [{transform_indices = @transform_0, window_bounds = array<i64: 256, 128>}, {pipeline_mode = #tpu.pipeline_mode<synchronous>, transform_indices = @transform_1, window_bounds = array<i64: 2, 128, 128>}, {pipeline_mode = #tpu.pipeline_mode<synchronous>, transform_indices = @transform_2, window_bounds = array<i64: 1, 128>}, {transform_indices = @transform_3, window_bounds = array<i64: 16, 2, 16, 128>}]} {
    %c0 = arith.constant 0 : index
    %c0_0 = arith.constant 0 : index
    %0 = vector.load %arg1[%c0, %c0_0] : memref<256x128xbf16, #tpu.memory_space<vmem>>, vector<256x128xbf16>
    %c0_1 = arith.constant 0 : index
    %c0_2 = arith.constant 0 : index
    %1 = vector.load %arg3[%c0_1, %c0_2] : memref<1x128xf32, #tpu.memory_space<vmem>>, vector<1x128xf32>
    %c0_3 = arith.constant 0 : index
    %c0_4 = arith.constant 0 : index
    %c0_5 = arith.constant 0 : index
    %2 = vector.load %arg2[%c0_3, %c0_4, %c0_5] : memref<2x128x128xbf16, #tpu.memory_space<vmem>>, vector<1x128x128xbf16>
    %3 = vector.shape_cast %2 : vector<1x128x128xbf16> to vector<128x128xbf16>
    %cst = arith.constant dense<0.000000e+00> : vector<256x128xf32>
    %4 = tpu.matmul %0, %3, %cst {dimension_numbers = #tpu.dot_dimension_numbers<[1], [0], [0], [1], [0, 0, 1, 1], [], []>} : vector<256x128xbf16>, vector<128x128xbf16>, vector<256x128xf32> -> vector<256x128xf32>
    %5 = vector.broadcast %1 : vector<1x128xf32> to vector<256x128xf32>
    %6 = arith.addf %4, %5 : vector<256x128xf32>
    %7 = vector.shape_cast %6 : vector<256x128xf32> to vector<16x16x128xf32>
    %c0_6 = arith.constant 0 : index
    %c0_7 = arith.constant 0 : index
    %c0_8 = arith.constant 0 : index
    %c0_9 = arith.constant 0 : index
    %8 = vector.load %arg4[%c0_6, %c0_7, %c0_8, %c0_9] : memref<16x2x16x128xf32, #tpu.memory_space<vmem>>, vector<16x1x16x128xf32>
    %9 = vector.shape_cast %8 : vector<16x1x16x128xf32> to vector<16x16x128xf32>
    %10 = vector.shape_cast %7 : vector<16x16x128xf32> to vector<16x1x16x128xf32>
    tpu.vector_store %arg4[%c0_6, %c0_7, %c0_8, %c0_9], %10 {strides = array<i32>} : memref<16x2x16x128xf32, #tpu.memory_space<vmem>>, vector<16x1x16x128xf32>,
    %c1 = arith.constant 1 : index
    %c0_10 = arith.constant 0 : index
    %c0_11 = arith.constant 0 : index
    %11 = vector.load %arg2[%c1, %c0_10, %c0_11] : memref<2x128x128xbf16, #tpu.memory_space<vmem>>, vector<1x128x128xbf16>
    %12 = vector.shape_cast %11 : vector<1x128x128xbf16> to vector<128x128xbf16>
    %cst_12 = arith.constant dense<0.000000e+00> : vector<256x128xf32>
    %13 = tpu.matmul %0, %12, %cst_12 {dimension_numbers = #tpu.dot_dimension_numbers<[1], [0], [0], [1], [0, 0, 1, 1], [], []>} : vector<256x128xbf16>, vector<128x128xbf16>, vector<256x128xf32> -> vector<256x128xf32>
    %14 = vector.broadcast %1 : vector<1x128xf32> to vector<256x128xf32>
    %15 = arith.addf %13, %14 : vector<256x128xf32>
    %16 = vector.shape_cast %15 : vector<256x128xf32> to vector<16x16x128xf32>
    %c0_13 = arith.constant 0 : index
    %c1_14 = arith.constant 1 : index
    %c0_15 = arith.constant 0 : index
    %c0_16 = arith.constant 0 : index
    %17 = vector.load %arg4[%c0_13, %c1_14, %c0_15, %c0_16] : memref<16x2x16x128xf32, #tpu.memory_space<vmem>>, vector<16x1x16x128xf32>
    %18 = vector.shape_cast %17 : vector<16x1x16x128xf32> to vector<16x16x128xf32>
    %19 = vector.shape_cast %16 : vector<16x16x128xf32> to vector<16x1x16x128xf32>
    tpu.vector_store %arg4[%c0_13, %c1_14, %c0_15, %c0_16], %19 {strides = array<i32>} : memref<16x2x16x128xf32, #tpu.memory_space<vmem>>, vector<16x1x16x128xf32>,
    return
  }
  func.func @transform_0(%arg0: i32) -> (i32, i32) {
    %c0_i32 = arith.constant 0 : i32
    %c0_i32_0 = arith.constant 0 : i32
    return %arg0, %c0_i32 : i32, i32
  }
  func.func @transform_1(%arg0: i32) -> (i32, i32, i32) {
    %c0_i32 = arith.constant 0 : i32
    %c0_i32_0 = arith.constant 0 : i32
    %c0_i32_1 = arith.constant 0 : i32
    %c0_i32_2 = arith.constant 0 : i32
    return %c0_i32, %c0_i32_0, %c0_i32_1 : i32, i32, i32
  }
  func.func @transform_2(%arg0: i32) -> (i32, i32) {
    %c0_i32 = arith.constant 0 : i32
    %c0_i32_0 = arith.constant 0 : i32
    %c0_i32_1 = arith.constant 0 : i32
    return %c0_i32, %c0_i32_0 : i32, i32
  }
  func.func @transform_3(%arg0: i32) -> (i32, i32, i32, i32) {
    %c0_i32 = arith.constant 0 : i32
    %c0_i32_0 = arith.constant 0 : i32
    %c0_i32_1 = arith.constant 0 : i32
    %c0_i32_2 = arith.constant 0 : i32
    return %arg0, %c0_i32, %c0_i32_0, %c0_i32_1 : i32, i32, i32, i32
  }
}

</mosaic_0001>

<llo_original>
// kernel: tpu_custom_call.1
$region0: #{tpu_custom_call.1}
  #allocation0 [shape = 'u32[]', space=smem, size = 0x4, offset = 0x4, fixed_abs, tag = 'smem constant byte address 0x4 - core index']
  #allocation1 [shape = 'u32[144,128]{1,0:T(1,128)}', space=vmem, size = 0x12000, scoped, tag = 'internal scratch']
  %s0 = inlined_call_operand.hbm [shape: bf16[512,128], index: 0, kind: input, shape index: {}]
  %s1 = inlined_call_operand.hbm [shape: bf16[2,128,128], index: 1, kind: input, shape index: {}]
  %s2 = inlined_call_operand.vmem [shape: f32[1,128], index: 2, kind: input, shape index: {}]
  %s3 = inlined_call_operand.hbm [shape: f32[32,2,16,128], index: 3, kind: output, shape index: {}]
  %s4 = sld [smem:[#allocation0]]
  $region53: #{tpu_custom_call.1} parent=0
    _
  %s6 = ssub.s32 1, %s4
  %s7 = scalar_select 0, %s6, %s4
  $region1: #{tpu_custom_call.1} parent=0
    #allocation2 [shape = 'u8[131072]{0}', space=vmem, size = 0x20000, scoped, tag = 'input window, operand 0']
    #allocation3 [shape = 's32[2]{0}', space=sflag, size = 0x8, scoped, tag = 'scoped memory for tpu_custom_call.1']
    #allocation4 [shape = 's32[2]{0}', space=sflag, size = 0x8, scoped, tag = 'scoped memory for tpu_custom_call.1']
    #allocation5 [shape = 'u8[65536]{0}', space=vmem, size = 0x10000, scoped, tag = 'input window, operand 1, single buffered']
    #allocation6 [shape = 's32[1]{0}', space=sflag, size = 0x4, scoped, tag = 'scoped memory for tpu_custom_call.1']
    #allocation7 [shape = 'u8[524288]{0}', space=vmem, size = 0x80000, scoped, tag = 'output window, operand 0']
    %8 = vsyncpa [#allocation3], 0
    %s9 = scalar_lea.sflag [#allocation3], 1
    %10 = vsyncpa %s9, 0
    %11 = vsyncpa [#allocation6], 0
    %12 = vsyncpa [#allocation4], 0
    %s13 = scalar_lea.sflag [#allocation4], 1
    %14 = vsyncpa %s13, 0
    loop: start=0, step=1, limit=4
    $region2: #{tpu_custom_call.1} parent=1 // loop_pre_header
      _
    $region3: #{tpu_custom_call.1} parent=1 // loop_header
      %s16 = sphi 0, %s20
      %p17 = scmp.ge.s32.totalorder %s16, 4
      %s26 = sphi 0, %s28
      %s29 = sphi 0, %s26
      %s30 = sphi 0, %s29
      %s46 = sphi 0, %s30
      %s50 = sphi 0, %s50
      %s52 = sphi 0, %s50
      %s53 = sphi 0, %s52
      %s67 = sphi 0, %s53
      %s71 = sphi 0, %s71
      %s73 = sphi 0, %s71
      %s74 = sphi 0, %s73
      %s88 = sphi 0, %s74
      %s94 = sphi 0, %s96
      %s97 = sphi 0, %s94
      %s98 = sphi 0, %s97
      %s114 = sphi 0, %s98
    $region4: #{tpu_custom_call.1} parent=1 // loop_header_branch
      %19 = sbr.rel (%p17) target = $region8
    $region5: #{tpu_custom_call.1} parent=1 // loop_body
      %s21 = ssub.s32 %s16, 1
      %s22 = ssub.s32 %s16, 2
      %s23 = sadd.s32 %s16, 1
      %s24 = ssub.s32 %s16, %s23
      %p25 = scmp.eq.s32.totalorder %s24, 0
      %s27 = sadd.s32 %s26, 1
      %s28 = scalar_select %p25, %s26, %s27
      %p31 = pneg %p25
      %p32 = scmp.eq.s32.totalorder %s16, 1
      %p33 = por %p31, %p32
      %p34 = scmp.ne.s32.totalorder %s26, %s29
      %p35 = scmp.eq.s32.totalorder %s16, 0
      %p36 = por %p34, %p35
      %p37 = scmp.ne.s32.totalorder %s26, %s29
      %p38 = scmp.eq.s32.totalorder %s21, 1
      %p39 = por %p37, %p38
      %p40 = scmp.ne.s32.totalorder %s29, %s30
      %p41 = scmp.eq.s32.totalorder %s21, 0
      %p42 = por %p40, %p41
      %p43 = scmp.ne.s32.totalorder %s29, %s30
      %p44 = scmp.eq.s32.totalorder %s22, 1
      %p45 = por %p43, %p44
      %p47 = scmp.ne.s32.totalorder %s30, %s46
      %p48 = scmp.eq.s32.totalorder %s22, 0
      %p49 = por %p47, %p48
      %s51 = sadd.s32 %s50, 1
      %p54 = scmp.eq.s32.totalorder %s16, 1
      %p55 = scmp.ne.s32.totalorder %s50, %s52
      %p56 = scmp.eq.s32.totalorder %s16, 0
      %p57 = por %p55, %p56
      %p58 = scmp.ne.s32.totalorder %s50, %s52
      %p59 = scmp.eq.s32.totalorder %s21, 1
      %p60 = por %p58, %p59
      %p61 = scmp.ne.s32.totalorder %s52, %s53
      %p62 = scmp.eq.s32.totalorder %s21, 0
      %p63 = por %p61, %p62
      %p64 = scmp.ne.s32.totalorder %s52, %s53
      %p65 = scmp.eq.s32.totalorder %s22, 1
      %p66 = por %p64, %p65
      %p68 = scmp.ne.s32.totalorder %s53, %s67
      %p69 = scmp.eq.s32.totalorder %s22, 0
      %p70 = por %p68, %p69
      %s72 = sadd.s32 %s71, 1
      %p75 = scmp.eq.s32.totalorder %s16, 1
      %p76 = scmp.ne.s32.totalorder %s71, %s73
      %p77 = scmp.eq.s32.totalorder %s16, 0
      %p78 = por %p76, %p77
      %p79 = scmp.ne.s32.totalorder %s71, %s73
      %p80 = scmp.eq.s32.totalorder %s21, 1
      %p81 = por %p79, %p80
      %p82 = scmp.ne.s32.totalorder %s73, %s74
      %p83 = scmp.eq.s32.totalorder %s21, 0
      %p84 = por %p82, %p83
      %p85 = scmp.ne.s32.totalorder %s73, %s74
      %p86 = scmp.eq.s32.totalorder %s22, 1
      %p87 = por %p85, %p86
      %p89 = scmp.ne.s32.totalorder %s74, %s88
      %p90 = scmp.eq.s32.totalorder %s22, 0
      %p91 = por %p89, %p90
      %s92 = ssub.s32 %s16, %s23
      %p93 = scmp.eq.s32.totalorder %s92, 0
      %s95 = sadd.s32 %s94, 1
      %s96 = scalar_select %p93, %s94, %s95
      %p99 = pneg %p93
      %p100 = scmp.eq.s32.totalorder %s16, 1
      %p101 = por %p99, %p100
      %p102 = scmp.ne.s32.totalorder %s94, %s97
      %p103 = scmp.eq.s32.totalorder %s16, 0
      %p104 = por %p102, %p103
      %p105 = scmp.ne.s32.totalorder %s94, %s97
      %p106 = scmp.eq.s32.totalorder %s21, 1
      %p107 = por %p105, %p106
      %p108 = scmp.ne.s32.totalorder %s97, %s98
      %p109 = scmp.eq.s32.totalorder %s21, 0
      %p110 = por %p108, %p109
      %p111 = scmp.ne.s32.totalorder %s97, %s98
      %p112 = scmp.eq.s32.totalorder %s22, 1
      %p113 = por %p111, %p112
      %p115 = scmp.ne.s32.totalorder %s98, %s114
      %p116 = scmp.eq.s32.totalorder %s22, 0
      %p117 = por %p115, %p116
      %p118 = scmp.le.s32.totalorder 1, %s16
      %p119 = scmp.lt.s32.totalorder %s16, 3
      %p120 = pnand %p118, %p119
      %p121 = pneg %p120
      // Predicated region
      $region9: #{tpu_custom_call.1} parent=5 // pred_check
        _
      $region10: #{tpu_custom_call.1} parent=5 // pred_check_branch
        %123 = sbr.rel (%p120) target = $region12
      $region11: #{tpu_custom_call.1} parent=5 // pred_region
        %s124 = ssub.s32 %s16, 1
        // Predicated region
        $region13: #{tpu_custom_call.1} parent=11 // pred_check
          %p125 = pneg %p63
        $region14: #{tpu_custom_call.1} parent=11 // pred_check_branch
          %127 = sbr.rel (%p125) target = $region16
        $region15: #{tpu_custom_call.1} parent=11 // pred_region
          %s129 = ssub.s32 2048, 2048
          %130 = vsyncadd [#allocation6], %s129
          %s131 = sshll.u32 [#allocation5], 4
          %s132 = int_to_ptr.vmem [resolvable:$true] %s131
          %137 = dma.hbm_to_vmem [thread:$0]  %s1, 2048, %s132, [#allocation6], 64, 64, 4
        $region16: #{tpu_custom_call.1} parent=11 // pred_fallthru
          _
        // Predicated region
        $region17: #{tpu_custom_call.1} parent=11 // pred_check
          %p138 = pneg %p84
        $region18: #{tpu_custom_call.1} parent=11 // pred_check_branch
          %140 = sbr.rel (%p138) target = $region20
        $region19: #{tpu_custom_call.1} parent=11 // pred_region
          _
        $region20: #{tpu_custom_call.1} parent=11 // pred_fallthru
          _
      $region12: #{tpu_custom_call.1} parent=5 // pred_fallthru
        _
      %p141 = scmp.lt.s32.totalorder %s16, 2
      // Predicated region
      $region21: #{tpu_custom_call.1} parent=5 // pred_check
        %p142 = pneg %p141
      $region22: #{tpu_custom_call.1} parent=5 // pred_check_branch
        %144 = sbr.rel (%p142) target = $region24
      $region23: #{tpu_custom_call.1} parent=5 // pred_region
        // Predicated region
        $region25: #{tpu_custom_call.1} parent=23 // pred_check
          %p145 = pneg %p36
        $region26: #{tpu_custom_call.1} parent=23 // pred_check_branch
          %147 = sbr.rel (%p145) target = $region28
        $region27: #{tpu_custom_call.1} parent=23 // pred_region
          %s148 = sand.u32 %s26, 1
          %s149 = scalar_lea.sflag [#allocation3], %s148
          %s150 = sand.u32 %s26, 1
          %s151 = smul.addr %s150, 128
          %s152 = scalar_lea.vmem [#allocation2], %s151
          %s153 = smul.u32 32, %s16
          %s155 = ssub.s32 2048, 2048
          %156 = vsyncadd %s149, %s155
          %s157 = smul.addr %s153, 64
          %s158 = scalar_lea.hbm %s0, %s157
          %s159 = sshll.u32 %s152, 4
          %s160 = int_to_ptr.vmem [resolvable:$true] %s159
          %165 = dma.hbm_to_vmem [thread:$0]  %s158, 2048, %s160, %s149, 64, 64, 4
        $region28: #{tpu_custom_call.1} parent=23 // pred_fallthru
          _
      $region24: #{tpu_custom_call.1} parent=5 // pred_fallthru
        _
      %p166 = scmp.le.s32.totalorder 1, %s16
      %p167 = scmp.lt.s32.totalorder %s16, 3
      %p168 = pnand %p166, %p167
      %p169 = pneg %p168
      // Predicated region
      $region29: #{tpu_custom_call.1} parent=5 // pred_check
        _
      $region30: #{tpu_custom_call.1} parent=5 // pred_check_branch
        %171 = sbr.rel (%p168) target = $region32
      $region31: #{tpu_custom_call.1} parent=5 // pred_region
        %s172 = ssub.s32 %s16, 1
        %s173 = sand.u32 %s29, 1
        %s174 = scalar_lea.sflag [#allocation3], %s173
        %s175 = sand.u32 %s29, 1
        %s176 = smul.addr %s175, 128
        %s177 = scalar_lea.vmem [#allocation2], %s176
        // Predicated region
        $region33: #{tpu_custom_call.1} parent=31 // pred_check
          %p178 = pneg %p42
        $region34: #{tpu_custom_call.1} parent=31 // pred_check_branch
          %180 = sbr.rel (%p178) target = $region36
        $region35: #{tpu_custom_call.1} parent=31 // pred_region
          %181 = dma.done %s174, 2048
        $region36: #{tpu_custom_call.1} parent=31 // pred_fallthru
          _
        // Predicated region
        $region37: #{tpu_custom_call.1} parent=31 // pred_check
          %p182 = pneg %p63
        $region38: #{tpu_custom_call.1} parent=31 // pred_check_branch
          %184 = sbr.rel (%p182) target = $region40
        $region39: #{tpu_custom_call.1} parent=31 // pred_region
          %185 = dma.done [#allocation6], 2048
        $region40: #{tpu_custom_call.1} parent=31 // pred_fallthru
          _
        %s186 = sand.u32 %s29, 1
        %s187 = scalar_lea.sflag [#allocation3], %s186
        %s188 = sand.u32 %s29, 1
        %s189 = smul.addr %s188, 128
        %s190 = scalar_lea.vmem [#allocation2], %s189
        %p191 = pneg %p42
        %p192 = pneg %p39
        %p193 = pneg %p63
        %p194 = pneg %p60
        %p195 = pneg %p84
        %p196 = pneg %p81
        %p197 = pneg %p110
        %p198 = pneg %p107
        %s199 = sand.u32 %s97, 1
        %s200 = scalar_lea.sflag [#allocation4], %s199
        %s201 = sand.u32 %s97, 1
        %s202 = smul.addr %s201, 512
        %s203 = scalar_lea.vmem [#allocation7], %s202
        %s204 = smul.u32 32, %s21
        %s205 = smul.u32 16, %s21
        %v207 = vld [vmem:[%s177] sm:$0xf]
        %v208 = vld [vmem:[%s177 + $0x4] sm:$0xf]
        %v209 = vld [vmem:[%s177 + $0x8] sm:$0xf]
        %v210 = vld [vmem:[%s177 + $0xc] sm:$0xf]
        %v211 = vld [vmem:[%s177 + $0x10] sm:$0xf]
        %v212 = vld [vmem:[%s177 + $0x14] sm:$0xf]
        %v213 = vld [vmem:[%s177 + $0x18] sm:$0xf]
        %v214 = vld [vmem:[%s177 + $0x1c] sm:$0xf]
        %v215 = vld [vmem:[%s177 + $0x20] sm:$0xf]
        %v216 = vld [vmem:[%s177 + $0x24] sm:$0xf]
        %v217 = vld [vmem:[%s177 + $0x28] sm:$0xf]
        %v218 = vld [vmem:[%s177 + $0x2c] sm:$0xf]
        %v219 = vld [vmem:[%s177 + $0x30] sm:$0xf]
        %v220 = vld [vmem:[%s177 + $0x34] sm:$0xf]
        %v221 = vld [vmem:[%s177 + $0x38] sm:$0xf]
        %v222 = vld [vmem:[%s177 + $0x3c] sm:$0xf]
        %v223 = vld [vmem:[%s177 + $0x40] sm:$0xf]
        %v224 = vld [vmem:[%s177 + $0x44] sm:$0xf]
        %v225 = vld [vmem:[%s177 + $0x48] sm:$0xf]
        %v226 = vld [vmem:[%s177 + $0x4c] sm:$0xf]
        %v227 = vld [vmem:[%s177 + $0x50] sm:$0xf]
        %v228 = vld [vmem:[%s177 + $0x54] sm:$0xf]
        %v229 = vld [vmem:[%s177 + $0x58] sm:$0xf]
        %v230 = vld [vmem:[%s177 + $0x5c] sm:$0xf]
        %v231 = vld [vmem:[%s177 + $0x60] sm:$0xf]
        %v232 = vld [vmem:[%s177 + $0x64] sm:$0xf]
        %v233 = vld [vmem:[%s177 + $0x68] sm:$0xf]
        %v234 = vld [vmem:[%s177 + $0x6c] sm:$0xf]
        %v235 = vld [vmem:[%s177 + $0x70] sm:$0xf]
        %v236 = vld [vmem:[%s177 + $0x74] sm:$0xf]
        %v237 = vld [vmem:[%s177 + $0x78] sm:$0xf]
        %v238 = vld [vmem:[%s177 + $0x7c] sm:$0xf]
        %v239 = vld [vmem:[%s2] sm:$0x1]
        %v240 = vld [vmem:[#allocation5] sm:$0xf]
        %v241 = vld [vmem:[#allocation5 + $0x4] sm:$0xf]
        %v242 = vld [vmem:[#allocation5 + $0x8] sm:$0xf]
        %v243 = vld [vmem:[#allocation5 + $0xc] sm:$0xf]
        %v244 = vld [vmem:[#allocation5 + $0x10] sm:$0xf]
        %v245 = vld [vmem:[#allocation5 + $0x14] sm:$0xf]
        %v246 = vld [vmem:[#allocation5 + $0x18] sm:$0xf]
        %v247 = vld [vmem:[#allocation5 + $0x1c] sm:$0xf]
        %v248 = vld [vmem:[#allocation5 + $0x20] sm:$0xf]
        %v249 = vld [vmem:[#allocation5 + $0x24] sm:$0xf]
        %v250 = vld [vmem:[#allocation5 + $0x28] sm:$0xf]
        %v251 = vld [vmem:[#allocation5 + $0x2c] sm:$0xf]
        %v252 = vld [vmem:[#allocation5 + $0x30] sm:$0xf]
        %v253 = vld [vmem:[#allocation5 + $0x34] sm:$0xf]
        %v254 = vld [vmem:[#allocation5 + $0x38] sm:$0xf]
        %v255 = vld [vmem:[#allocation5 + $0x3c] sm:$0xf]
        %v257 = vlaneseq
        %v258 = vshrl.u32 %v257, 7
        %v259 = vsub.s32 0, %v258
        %v260 = vrot.slane %v239, %v259
        %v294 = vunpack.c.l.b16 %v207
        %v295 = vunpack.c.l.b16 %v208
        %v296 = vunpack.c.l.b16 %v209
        %v297 = vunpack.c.l.b16 %v210
        %v298 = vunpack.c.l.b16 %v211
        %v299 = vunpack.c.l.b16 %v212
        %v300 = vunpack.c.l.b16 %v213
        %v301 = vunpack.c.l.b16 %v214
        %v302 = vunpack.c.l.b16 %v215
        %v303 = vunpack.c.l.b16 %v216
        %v304 = vunpack.c.l.b16 %v217
        %v305 = vunpack.c.l.b16 %v218
        %v306 = vunpack.c.l.b16 %v219
        %v307 = vunpack.c.l.b16 %v220
        %v308 = vunpack.c.l.b16 %v221
        %v309 = vunpack.c.l.b16 %v222
        %v310 = vunpack.c.l.b16 %v223
        %v311 = vunpack.c.l.b16 %v224
        %v312 = vunpack.c.l.b16 %v225
        %v313 = vunpack.c.l.b16 %v226
        %v314 = vunpack.c.l.b16 %v227
        %v315 = vunpack.c.l.b16 %v228
        %v316 = vunpack.c.l.b16 %v229
        %v317 = vunpack.c.l.b16 %v230
        %v318 = vunpack.c.l.b16 %v231
        %v319 = vunpack.c.l.b16 %v232
        %v320 = vunpack.c.l.b16 %v233
        %v321 = vunpack.c.l.b16 %v234
        %v322 = vunpack.c.l.b16 %v235
        %v323 = vunpack.c.l.b16 %v236
        %v324 = vunpack.c.l.b16 %v237
        %v325 = vunpack.c.l.b16 %v238
        %v326 = vpack.c.b16 %v295, %v294
        %v327 = vpack.c.b16 %v297, %v296
        %v328 = vpack.c.b16 %v299, %v298
        %v329 = vpack.c.b16 %v301, %v300
        %v330 = vpack.c.b16 %v303, %v302
        %v331 = vpack.c.b16 %v305, %v304
        %v332 = vpack.c.b16 %v307, %v306
        %v333 = vpack.c.b16 %v309, %v308
        %v334 = vpack.c.b16 %v311, %v310
        %v335 = vpack.c.b16 %v313, %v312
        %v336 = vpack.c.b16 %v315, %v314
        %v337 = vpack.c.b16 %v317, %v316
        %v338 = vpack.c.b16 %v319, %v318
        %v339 = vpack.c.b16 %v321, %v320
        %v340 = vpack.c.b16 %v323, %v322
        %v341 = vpack.c.b16 %v325, %v324
        %v374 = vunpack.c.l.b16 %v240
        %v375 = vunpack.c.l.b16 %v241
        %v376 = vunpack.c.l.b16 %v242
        %v377 = vunpack.c.l.b16 %v243
        %v378 = vunpack.c.l.b16 %v244
        %v379 = vunpack.c.l.b16 %v245
        %v380 = vunpack.c.l.b16 %v246
        %v381 = vunpack.c.l.b16 %v247
        %v382 = vunpack.c.l.b16 %v248
        %v383 = vunpack.c.l.b16 %v249
        %v384 = vunpack.c.l.b16 %v250
        %v385 = vunpack.c.l.b16 %v251
        %v386 = vunpack.c.l.b16 %v252
        %v387 = vunpack.c.l.b16 %v253
        %v388 = vunpack.c.l.b16 %v254
        %v389 = vunpack.c.l.b16 %v255
        %v390 = vpack.c.b16 %v375, %v374
        %v391 = vpack.c.b16 %v377, %v376
        %v392 = vpack.c.b16 %v379, %v378
        %v393 = vpack.c.b16 %v381, %v380
        %v394 = vpack.c.b16 %v383, %v382
        %v395 = vpack.c.b16 %v385, %v384
        %v396 = vpack.c.b16 %v387, %v386
        %v397 = vpack.c.b16 %v389, %v388
        %406 = vmatprep.subr.bf16.mxu0 0
        %407 = vmatpush1.bf16.msra.mxu0 %v390
        %408 = vmatprep.subr.bf16.mxu0 0
        %409 = vmatpush1.bf16.msra.mxu0 %v391
        %410 = vmatprep.subr.bf16.mxu0 0
        %411 = vmatpush1.bf16.msra.mxu0 %v392
        %412 = vmatprep.subr.bf16.mxu0 0
        %413 = vmatpush1.bf16.msra.mxu0 %v393
        %414 = vmatprep.subr.bf16.mxu0 0
        %415 = vmatpush1.bf16.msra.mxu0 %v394
        %416 = vmatprep.subr.bf16.mxu0 0
        %417 = vmatpush1.bf16.msra.mxu0 %v395
        %418 = vmatprep.subr.bf16.mxu0 0
        %419 = vmatpush1.bf16.msra.mxu0 %v396
        %420 = vmatprep.subr.bf16.mxu0 0
        %421 = vmatpush1.bf16.msra.mxu0 %v397
        %422 = vmatprep.subr.bf16.mxu0 0
        %423 = vmatpush1.bf16.msra.mxu0 0
        %424 = vmatprep.subr.bf16.mxu0 0
        %425 = vmatpush1.bf16.msra.mxu0 0
        %426 = vmatprep.subr.bf16.mxu0 0
        %427 = vmatpush1.bf16.msra.mxu0 0
        %428 = vmatprep.subr.bf16.mxu0 0
        %429 = vmatpush1.bf16.msra.mxu0 0
        %430 = vmatprep.subr.bf16.mxu0 0
        %431 = vmatpush1.bf16.msra.mxu0 0
        %432 = vmatprep.subr.bf16.mxu0 0
        %433 = vmatpush1.bf16.msra.mxu0 0
        %434 = vmatprep.subr.bf16.mxu0 0
        %435 = vmatpush1.bf16.msra.mxu0 0
        %436 = vmatprep.subr.bf16.mxu0 0
        %437 = vmatpush1.bf16.msra.mxu0 0
        %438 = vmatprep.mubr.bf16.mxu0 0
        %439 = vmatmul.mubr.bf16.gmra.mrb[0].mxu0 %v326
        %v440 = vpop.f32.mrb[0].mxu0
        %v441 = vadd.f32 %v260, %v440
        %v442 = vpop.f32.mrb[0].mxu0
        %v443 = vpop.f32.mrb[0].mxu0
        %v444 = vadd.f32 %v260, %v443
        %v445 = vpop.f32.mrb[0].mxu0
        %446 = vmatprep.mubr.bf16.mxu0 0
        %447 = vmatmul.mubr.bf16.gmra.mrb[0].mxu0 %v327
        %v448 = vpop.f32.mrb[0].mxu0
        %v449 = vadd.f32 %v260, %v448
        %v450 = vpop.f32.mrb[0].mxu0
        %v451 = vpop.f32.mrb[0].mxu0
        %v452 = vadd.f32 %v260, %v451
        %v453 = vpop.f32.mrb[0].mxu0
        %454 = vmatprep.mubr.bf16.mxu0 0
        %455 = vmatmul.mubr.bf16.gmra.mrb[0].mxu0 %v328
        %v456 = vpop.f32.mrb[0].mxu0
        %v457 = vadd.f32 %v260, %v456
        %v458 = vpop.f32.mrb[0].mxu0
        %v459 = vpop.f32.mrb[0].mxu0
        %v460 = vadd.f32 %v260, %v459
        %v461 = vpop.f32.mrb[0].mxu0
        %462 = vmatprep.mubr.bf16.mxu0 0
        %463 = vmatmul.mubr.bf16.gmra.mrb[0].mxu0 %v329
        %v464 = vpop.f32.mrb[0].mxu0
        %v465 = vadd.f32 %v260, %v464
        %v466 = vpop.f32.mrb[0].mxu0
        %v467 = vpop.f32.mrb[0].mxu0
        %v468 = vadd.f32 %v260, %v467
        %v469 = vpop.f32.mrb[0].mxu0
        %470 = vmatprep.mubr.bf16.mxu0 0
        %471 = vmatmul.mubr.bf16.gmra.mrb[0].mxu0 %v330
        %v472 = vpop.f32.mrb[0].mxu0
        %v473 = vadd.f32 %v260, %v472
        %v474 = vpop.f32.mrb[0].mxu0
        %v475 = vpop.f32.mrb[0].mxu0
        %v476 = vadd.f32 %v260, %v475
        %v477 = vpop.f32.mrb[0].mxu0
        %478 = vmatprep.mubr.bf16.mxu0 0
        %479 = vmatmul.mubr.bf16.gmra.mrb[0].mxu0 %v331
        %v480 = vpop.f32.mrb[0].mxu0
        %v481 = vadd.f32 %v260, %v480
        %v482 = vpop.f32.mrb[0].mxu0
        %v483 = vpop.f32.mrb[0].mxu0
        %v484 = vadd.f32 %v260, %v483
        %v485 = vpop.f32.mrb[0].mxu0
        %486 = vmatprep.mubr.bf16.mxu0 0
        %487 = vmatmul.mubr.bf16.gmra.mrb[0].mxu0 %v332
        %v488 = vpop.f32.mrb[0].mxu0
        %v489 = vadd.f32 %v260, %v488
        %v490 = vpop.f32.mrb[0].mxu0
        %v491 = vpop.f32.mrb[0].mxu0
        %v492 = vadd.f32 %v260, %v491
        %v493 = vpop.f32.mrb[0].mxu0
        %494 = vmatprep.mubr.bf16.mxu0 0
        %495 = vmatmul.mubr.bf16.gmra.mrb[0].mxu0 %v333
        %v496 = vpop.f32.mrb[0].mxu0
        %v497 = vadd.f32 %v260, %v496
        %v498 = vpop.f32.mrb[0].mxu0
        %v499 = vpop.f32.mrb[0].mxu0
        %v500 = vadd.f32 %v260, %v499
        %v501 = vpop.f32.mrb[0].mxu0
        %502 = vmatprep.mubr.bf16.mxu0 0
        %503 = vmatmul.mubr.bf16.gmra.mrb[0].mxu0 %v334
        %v504 = vpop.f32.mrb[0].mxu0
        %v505 = vadd.f32 %v260, %v504
        %v506 = vpop.f32.mrb[0].mxu0
        %v507 = vpop.f32.mrb[0].mxu0
        %v508 = vadd.f32 %v260, %v507
        %v509 = vpop.f32.mrb[0].mxu0
        %510 = vmatprep.mubr.bf16.mxu0 0
        %511 = vmatmul.mubr.bf16.gmra.mrb[0].mxu0 %v335
        %v512 = vpop.f32.mrb[0].mxu0
        %v513 = vadd.f32 %v260, %v512
        %v514 = vpop.f32.mrb[0].mxu0
        %v515 = vpop.f32.mrb[0].mxu0
        %v516 = vadd.f32 %v260, %v515
        %v517 = vpop.f32.mrb[0].mxu0
        %518 = vmatprep.mubr.bf16.mxu0 0
        %519 = vmatmul.mubr.bf16.gmra.mrb[0].mxu0 %v336
        %v520 = vpop.f32.mrb[0].mxu0
        %v521 = vadd.f32 %v260, %v520
        %v522 = vpop.f32.mrb[0].mxu0
        %v523 = vpop.f32.mrb[0].mxu0
        %v524 = vadd.f32 %v260, %v523
        %v525 = vpop.f32.mrb[0].mxu0
        %526 = vmatprep.mubr.bf16.mxu0 0
        %527 = vmatmul.mubr.bf16.gmra.mrb[0].mxu0 %v337
        %v528 = vpop.f32.mrb[0].mxu0
        %v529 = vadd.f32 %v260, %v528
        %v530 = vpop.f32.mrb[0].mxu0
        %v531 = vpop.f32.mrb[0].mxu0
        %v532 = vadd.f32 %v260, %v531
        %v533 = vpop.f32.mrb[0].mxu0
        %534 = vmatprep.mubr.bf16.mxu0 0
        %535 = vmatmul.mubr.bf16.gmra.mrb[0].mxu0 %v338
        %v536 = vpop.f32.mrb[0].mxu0
        %v537 = vadd.f32 %v260, %v536
        %v538 = vpop.f32.mrb[0].mxu0
        %v539 = vpop.f32.mrb[0].mxu0
        %v540 = vadd.f32 %v260, %v539
        %v541 = vpop.f32.mrb[0].mxu0
        %542 = vmatprep.mubr.bf16.mxu0 0
        %543 = vmatmul.mubr.bf16.gmra.mrb[0].mxu0 %v339
        %v544 = vpop.f32.mrb[0].mxu0
        %v545 = vadd.f32 %v260, %v544
        %v546 = vpop.f32.mrb[0].mxu0
        %v547 = vpop.f32.mrb[0].mxu0
        %v548 = vadd.f32 %v260, %v547
        %v549 = vpop.f32.mrb[0].mxu0
        %550 = vmatprep.mubr.bf16.mxu0 0
        %551 = vmatmul.mubr.bf16.gmra.mrb[0].mxu0 %v340
        %v552 = vpop.f32.mrb[0].mxu0
        %v553 = vadd.f32 %v260, %v552
        %v554 = vpop.f32.mrb[0].mxu0
        %v555 = vpop.f32.mrb[0].mxu0
        %v556 = vadd.f32 %v260, %v555
        %v557 = vpop.f32.mrb[0].mxu0
        %558 = vmatprep.mubr.bf16.mxu0 0
        %559 = vmatmul.mubr.bf16.gmra.mrb[0].mxu0 %v341
        %v560 = vpop.f32.mrb[0].mxu0
        %v561 = vadd.f32 %v260, %v560
        %v562 = vpop.f32.mrb[0].mxu0
        %v563 = vpop.f32.mrb[0].mxu0
        %v564 = vadd.f32 %v260, %v563
        %v565 = vpop.f32.mrb[0].mxu0
        %566 = vdwg.mxu0
        %567 = vst [vmem:[%s203] sm:$0xff] %v441
        %568 = vst [vmem:[%s203 + $0x8] sm:$0xff] %v444
        %569 = vst [vmem:[%s203 + $0x20] sm:$0xff] %v449
        %570 = vst [vmem:[%s203 + $0x28] sm:$0xff] %v452
        %571 = vst [vmem:[%s203 + $0x40] sm:$0xff] %v457
        %572 = vst [vmem:[%s203 + $0x48] sm:$0xff] %v460
        %573 = vst [vmem:[%s203 + $0x60] sm:$0xff] %v465
        %574 = vst [vmem:[%s203 + $0x68] sm:$0xff] %v468
        %575 = vst [vmem:[%s203 + $0x80] sm:$0xff] %v473
        %576 = vst [vmem:[%s203 + $0x88] sm:$0xff] %v476
        %577 = vst [vmem:[%s203 + $0xa0] sm:$0xff] %v481
        %578 = vst [vmem:[%s203 + $0xa8] sm:$0xff] %v484
        %579 = vst [vmem:[%s203 + $0xc0] sm:$0xff] %v489
        %580 = vst [vmem:[%s203 + $0xc8] sm:$0xff] %v492
        %581 = vst [vmem:[%s203 + $0xe0] sm:$0xff] %v497
        %582 = vst [vmem:[%s203 + $0xe8] sm:$0xff] %v500
        %583 = vst [vmem:[%s203 + $0x100] sm:$0xff] %v505
        %584 = vst [vmem:[%s203 + $0x108] sm:$0xff] %v508
        %585 = vst [vmem:[%s203 + $0x120] sm:$0xff] %v513
        %586 = vst [vmem:[%s203 + $0x128] sm:$0xff] %v516
        %587 = vst [vmem:[%s203 + $0x140] sm:$0xff] %v521
        %588 = vst [vmem:[%s203 + $0x148] sm:$0xff] %v524
        %589 = vst [vmem:[%s203 + $0x160] sm:$0xff] %v529
        %590 = vst [vmem:[%s203 + $0x168] sm:$0xff] %v532
        %591 = vst [vmem:[%s203 + $0x180] sm:$0xff] %v537
        %592 = vst [vmem:[%s203 + $0x188] sm:$0xff] %v540
        %593 = vst [vmem:[%s203 + $0x1a0] sm:$0xff] %v545
        %594 = vst [vmem:[%s203 + $0x1a8] sm:$0xff] %v548
        %595 = vst [vmem:[%s203 + $0x1c0] sm:$0xff] %v553
        %596 = vst [vmem:[%s203 + $0x1c8] sm:$0xff] %v556
        %597 = vst [vmem:[%s203 + $0x1e0] sm:$0xff] %v561
        %598 = vst [vmem:[%s203 + $0x1e8] sm:$0xff] %v564
        %s599 = scalar_lea.vmem [#allocation5], 64
        %v600 = vld [vmem:[%s599] sm:$0xf]
        %v601 = vld [vmem:[%s599 + $0x4] sm:$0xf]
        %v602 = vld [vmem:[%s599 + $0x8] sm:$0xf]
        %v603 = vld [vmem:[%s599 + $0xc] sm:$0xf]
        %v604 = vld [vmem:[%s599 + $0x10] sm:$0xf]
        %v605 = vld [vmem:[%s599 + $0x14] sm:$0xf]
        %v606 = vld [vmem:[%s599 + $0x18] sm:$0xf]
        %v607 = vld [vmem:[%s599 + $0x1c] sm:$0xf]
        %v608 = vld [vmem:[%s599 + $0x20] sm:$0xf]
        %v609 = vld [vmem:[%s599 + $0x24] sm:$0xf]
        %v610 = vld [vmem:[%s599 + $0x28] sm:$0xf]
        %v611 = vld [vmem:[%s599 + $0x2c] sm:$0xf]
        %v612 = vld [vmem:[%s599 + $0x30] sm:$0xf]
        %v613 = vld [vmem:[%s599 + $0x34] sm:$0xf]
        %v614 = vld [vmem:[%s599 + $0x38] sm:$0xf]
        %v615 = vld [vmem:[%s599 + $0x3c] sm:$0xf]
        %v632 = vunpack.c.l.b16 %v600
        %v633 = vunpack.c.l.b16 %v601
        %v634 = vunpack.c.l.b16 %v602
        %v635 = vunpack.c.l.b16 %v603
        %v636 = vunpack.c.l.b16 %v604
        %v637 = vunpack.c.l.b16 %v605
        %v638 = vunpack.c.l.b16 %v606
        %v639 = vunpack.c.l.b16 %v607
        %v640 = vunpack.c.l.b16 %v608
        %v641 = vunpack.c.l.b16 %v609
        %v642 = vunpack.c.l.b16 %v610
        %v643 = vunpack.c.l.b16 %v611
        %v644 = vunpack.c.l.b16 %v612
        %v645 = vunpack.c.l.b16 %v613
        %v646 = vunpack.c.l.b16 %v614
        %v647 = vunpack.c.l.b16 %v615
        %v648 = vpack.c.b16 %v633, %v632
        %v649 = vpack.c.b16 %v635, %v634
        %v650 = vpack.c.b16 %v637, %v636
        %v651 = vpack.c.b16 %v639, %v638
        %v652 = vpack.c.b16 %v641, %v640
        %v653 = vpack.c.b16 %v643, %v642
        %v654 = vpack.c.b16 %v645, %v644
        %v655 = vpack.c.b16 %v647, %v646
        %664 = vmatprep.subr.bf16.mxu0 0
        %665 = vmatpush1.bf16.msra.mxu0 %v648
        %666 = vmatprep.subr.bf16.mxu0 0
        %667 = vmatpush1.bf16.msra.mxu0 %v649
        %668 = vmatprep.subr.bf16.mxu0 0
        %669 = vmatpush1.bf16.msra.mxu0 %v650
        %670 = vmatprep.subr.bf16.mxu0 0
        %671 = vmatpush1.bf16.msra.mxu0 %v651
        %672 = vmatprep.subr.bf16.mxu0 0
        %673 = vmatpush1.bf16.msra.mxu0 %v652
        %674 = vmatprep.subr.bf16.mxu0 0
        %675 = vmatpush1.bf16.msra.mxu0 %v653
        %676 = vmatprep.subr.bf16.mxu0 0
        %677 = vmatpush1.bf16.msra.mxu0 %v654
        %678 = vmatprep.subr.bf16.mxu0 0
        %679 = vmatpush1.bf16.msra.mxu0 %v655
        %680 = vmatprep.subr.bf16.mxu0 0
        %681 = vmatpush1.bf16.msra.mxu0 0
        %682 = vmatprep.subr.bf16.mxu0 0
        %683 = vmatpush1.bf16.msra.mxu0 0
        %684 = vmatprep.subr.bf16.mxu0 0
        %685 = vmatpush1.bf16.msra.mxu0 0
        %686 = vmatprep.subr.bf16.mxu0 0
        %687 = vmatpush1.bf16.msra.mxu0 0
        %688 = vmatprep.subr.bf16.mxu0 0
        %689 = vmatpush1.bf16.msra.mxu0 0
        %690 = vmatprep.subr.bf16.mxu0 0
        %691 = vmatpush1.bf16.msra.mxu0 0
        %692 = vmatprep.subr.bf16.mxu0 0
        %693 = vmatpush1.bf16.msra.mxu0 0
        %694 = vmatprep.subr.bf16.mxu0 0
        %695 = vmatpush1.bf16.msra.mxu0 0
        %696 = vmatprep.mubr.bf16.mxu0 0
        %697 = vmatmul.mubr.bf16.gmra.mrb[0].mxu0 %v326
        %v698 = vpop.f32.mrb[0].mxu0
        %v699 = vadd.f32 %v260, %v698
        %v700 = vpop.f32.mrb[0].mxu0
        %v701 = vpop.f32.mrb[0].mxu0
        %v702 = vadd.f32 %v260, %v701
        %v703 = vpop.f32.mrb[0].mxu0
        %704 = vmatprep.mubr.bf16.mxu0 0
        %705 = vmatmul.mubr.bf16.gmra.mrb[0].mxu0 %v327
        %v706 = vpop.f32.mrb[0].mxu0
        %v707 = vadd.f32 %v260, %v706
        %v708 = vpop.f32.mrb[0].mxu0
        %v709 = vpop.f32.mrb[0].mxu0
        %v710 = vadd.f32 %v260, %v709
        %v711 = vpop.f32.mrb[0].mxu0
        %712 = vmatprep.mubr.bf16.mxu0 0
        %713 = vmatmul.mubr.bf16.gmra.mrb[0].mxu0 %v328
        %v714 = vpop.f32.mrb[0].mxu0
        %v715 = vadd.f32 %v260, %v714
        %v716 = vpop.f32.mrb[0].mxu0
        %v717 = vpop.f32.mrb[0].mxu0
        %v718 = vadd.f32 %v260, %v717
        %v719 = vpop.f32.mrb[0].mxu0
        %720 = vmatprep.mubr.bf16.mxu0 0
        %721 = vmatmul.mubr.bf16.gmra.mrb[0].mxu0 %v329
        %v722 = vpop.f32.mrb[0].mxu0
        %v723 = vadd.f32 %v260, %v722
        %v724 = vpop.f32.mrb[0].mxu0
        %v725 = vpop.f32.mrb[0].mxu0
        %v726 = vadd.f32 %v260, %v725
        %v727 = vpop.f32.mrb[0].mxu0
        %728 = vmatprep.mubr.bf16.mxu0 0
        %729 = vmatmul.mubr.bf16.gmra.mrb[0].mxu0 %v330
        %v730 = vpop.f32.mrb[0].mxu0
        %v731 = vadd.f32 %v260, %v730
        %v732 = vpop.f32.mrb[0].mxu0
        %v733 = vpop.f32.mrb[0].mxu0
        %v734 = vadd.f32 %v260, %v733
        %v735 = vpop.f32.mrb[0].mxu0
        %736 = vmatprep.mubr.bf16.mxu0 0
        %737 = vmatmul.mubr.bf16.gmra.mrb[0].mxu0 %v331
        %v738 = vpop.f32.mrb[0].mxu0
        %v739 = vadd.f32 %v260, %v738
        %v740 = vpop.f32.mrb[0].mxu0
        %v741 = vpop.f32.mrb[0].mxu0
        %v742 = vadd.f32 %v260, %v741
        %v743 = vpop.f32.mrb[0].mxu0
        %744 = vmatprep.mubr.bf16.mxu0 0
        %745 = vmatmul.mubr.bf16.gmra.mrb[0].mxu0 %v332
        %v746 = vpop.f32.mrb[0].mxu0
        %v747 = vadd.f32 %v260, %v746
        %v748 = vpop.f32.mrb[0].mxu0
        %v749 = vpop.f32.mrb[0].mxu0
        %v750 = vadd.f32 %v260, %v749
        %v751 = vpop.f32.mrb[0].mxu0
        %752 = vmatprep.mubr.bf16.mxu0 0
        %753 = vmatmul.mubr.bf16.gmra.mrb[0].mxu0 %v333
        %v754 = vpop.f32.mrb[0].mxu0
        %v755 = vadd.f32 %v260, %v754
        %v756 = vpop.f32.mrb[0].mxu0
        %v757 = vpop.f32.mrb[0].mxu0
        %v758 = vadd.f32 %v260, %v757
        %v759 = vpop.f32.mrb[0].mxu0
        %760 = vmatprep.mubr.bf16.mxu0 0
        %761 = vmatmul.mubr.bf16.gmra.mrb[0].mxu0 %v334
        %v762 = vpop.f32.mrb[0].mxu0
        %v763 = vadd.f32 %v260, %v762
        %v764 = vpop.f32.mrb[0].mxu0
        %v765 = vpop.f32.mrb[0].mxu0
        %v766 = vadd.f32 %v260, %v765
        %v767 = vpop.f32.mrb[0].mxu0
        %768 = vmatprep.mubr.bf16.mxu0 0
        %769 = vmatmul.mubr.bf16.gmra.mrb[0].mxu0 %v335
        %v770 = vpop.f32.mrb[0].mxu0
        %v771 = vadd.f32 %v260, %v770
        %v772 = vpop.f32.mrb[0].mxu0
        %v773 = vpop.f32.mrb[0].mxu0
        %v774 = vadd.f32 %v260, %v773
        %v775 = vpop.f32.mrb[0].mxu0
        %776 = vmatprep.mubr.bf16.mxu0 0
        %777 = vmatmul.mubr.bf16.gmra.mrb[0].mxu0 %v336
        %v778 = vpop.f32.mrb[0].mxu0
        %v779 = vadd.f32 %v260, %v778
        %v780 = vpop.f32.mrb[0].mxu0
        %v781 = vpop.f32.mrb[0].mxu0
        %v782 = vadd.f32 %v260, %v781
        %v783 = vpop.f32.mrb[0].mxu0
        %784 = vmatprep.mubr.bf16.mxu0 0
        %785 = vmatmul.mubr.bf16.gmra.mrb[0].mxu0 %v337
        %v786 = vpop.f32.mrb[0].mxu0
        %v787 = vadd.f32 %v260, %v786
        %v788 = vpop.f32.mrb[0].mxu0
        %v789 = vpop.f32.mrb[0].mxu0
        %v790 = vadd.f32 %v260, %v789
        %v791 = vpop.f32.mrb[0].mxu0
        %792 = vmatprep.mubr.bf16.mxu0 0
        %793 = vmatmul.mubr.bf16.gmra.mrb[0].mxu0 %v338
        %v794 = vpop.f32.mrb[0].mxu0
        %v795 = vadd.f32 %v260, %v794
        %v796 = vpop.f32.mrb[0].mxu0
        %v797 = vpop.f32.mrb[0].mxu0
        %v798 = vadd.f32 %v260, %v797
        %v799 = vpop.f32.mrb[0].mxu0
        %800 = vmatprep.mubr.bf16.mxu0 0
        %801 = vmatmul.mubr.bf16.gmra.mrb[0].mxu0 %v339
        %v802 = vpop.f32.mrb[0].mxu0
        %v803 = vadd.f32 %v260, %v802
        %v804 = vpop.f32.mrb[0].mxu0
        %v805 = vpop.f32.mrb[0].mxu0
        %v806 = vadd.f32 %v260, %v805
        %v807 = vpop.f32.mrb[0].mxu0
        %808 = vmatprep.mubr.bf16.mxu0 0
        %809 = vmatmul.mubr.bf16.gmra.mrb[0].mxu0 %v340
        %v810 = vpop.f32.mrb[0].mxu0
        %v811 = vadd.f32 %v260, %v810
        %v812 = vpop.f32.mrb[0].mxu0
        %v813 = vpop.f32.mrb[0].mxu0
        %v814 = vadd.f32 %v260, %v813
        %v815 = vpop.f32.mrb[0].mxu0
        %816 = vmatprep.mubr.bf16.mxu0 0
        %817 = vmatmul.mubr.bf16.gmra.mrb[0].mxu0 %v341
        %v818 = vpop.f32.mrb[0].mxu0
        %v819 = vadd.f32 %v260, %v818
        %v820 = vpop.f32.mrb[0].mxu0
        %v821 = vpop.f32.mrb[0].mxu0
        %v822 = vadd.f32 %v260, %v821
        %v823 = vpop.f32.mrb[0].mxu0
        %824 = vdwg.mxu0
        %s825 = scalar_lea.vmem %s203, 16 [#allocation7]
        %826 = vst [vmem:[%s825] sm:$0xff] %v699
        %827 = vst [vmem:[%s825 + $0x8] sm:$0xff] %v702
        %828 = vst [vmem:[%s825 + $0x20] sm:$0xff] %v707
        %829 = vst [vmem:[%s825 + $0x28] sm:$0xff] %v710
        %830 = vst [vmem:[%s825 + $0x40] sm:$0xff] %v715
        %831 = vst [vmem:[%s825 + $0x48] sm:$0xff] %v718
        %832 = vst [vmem:[%s825 + $0x60] sm:$0xff] %v723
        %833 = vst [vmem:[%s825 + $0x68] sm:$0xff] %v726
        %834 = vst [vmem:[%s825 + $0x80] sm:$0xff] %v731
        %835 = vst [vmem:[%s825 + $0x88] sm:$0xff] %v734
        %836 = vst [vmem:[%s825 + $0xa0] sm:$0xff] %v739
        %837 = vst [vmem:[%s825 + $0xa8] sm:$0xff] %v742
        %838 = vst [vmem:[%s825 + $0xc0] sm:$0xff] %v747
        %839 = vst [vmem:[%s825 + $0xc8] sm:$0xff] %v750
        %840 = vst [vmem:[%s825 + $0xe0] sm:$0xff] %v755
        %841 = vst [vmem:[%s825 + $0xe8] sm:$0xff] %v758
        %842 = vst [vmem:[%s825 + $0x100] sm:$0xff] %v763
        %843 = vst [vmem:[%s825 + $0x108] sm:$0xff] %v766
        %844 = vst [vmem:[%s825 + $0x120] sm:$0xff] %v771
        %845 = vst [vmem:[%s825 + $0x128] sm:$0xff] %v774
        %846 = vst [vmem:[%s825 + $0x140] sm:$0xff] %v779
        %847 = vst [vmem:[%s825 + $0x148] sm:$0xff] %v782
        %848 = vst [vmem:[%s825 + $0x160] sm:$0xff] %v787
        %849 = vst [vmem:[%s825 + $0x168] sm:$0xff] %v790
        %850 = vst [vmem:[%s825 + $0x180] sm:$0xff] %v795
        %851 = vst [vmem:[%s825 + $0x188] sm:$0xff] %v798
        %852 = vst [vmem:[%s825 + $0x1a0] sm:$0xff] %v803
        %853 = vst [vmem:[%s825 + $0x1a8] sm:$0xff] %v806
        %854 = vst [vmem:[%s825 + $0x1c0] sm:$0xff] %v811
        %855 = vst [vmem:[%s825 + $0x1c8] sm:$0xff] %v814
        %856 = vst [vmem:[%s825 + $0x1e0] sm:$0xff] %v819
        %857 = vst [vmem:[%s825 + $0x1e8] sm:$0xff] %v822
        %s858 = sand.u32 %s97, 1
        %s859 = scalar_lea.sflag [#allocation4], %s858
        %s860 = sand.u32 %s97, 1
        %s861 = smul.addr %s860, 512
        %s862 = scalar_lea.vmem [#allocation7], %s861
        // Predicated region
        $region41: #{tpu_custom_call.1} parent=31 // pred_check
          %p863 = pneg %p107
        $region42: #{tpu_custom_call.1} parent=31 // pred_check_branch
          %865 = sbr.rel (%p863) target = $region44
        $region43: #{tpu_custom_call.1} parent=31 // pred_region
          %s866 = smul.u32 16, %s21
          %s868 = ssub.s32 8192, 8192
          %869 = vsyncadd %s859, %s868
          %s870 = smul.addr %s866, 4
          %s871 = smul.addr %s870, 128
          %s872 = scalar_lea.hbm %s3, %s871
          %s873 = sshll.u32 %s862, 4
          %s874 = int_to_ptr.vmem [resolvable:$true] %s873
          %879 = dma.vmem_to_hbm [thread:$0]  %s874, 8192, %s872, %s859, 128, 128, 8
        $region44: #{tpu_custom_call.1} parent=31 // pred_fallthru
          _
      $region32: #{tpu_custom_call.1} parent=5 // pred_fallthru
        _
      %p880 = scmp.le.s32.totalorder 2, %s16
      // Predicated region
      $region45: #{tpu_custom_call.1} parent=5 // pred_check
        %p881 = pneg %p880
      $region46: #{tpu_custom_call.1} parent=5 // pred_check_branch
        %883 = sbr.rel (%p881) target = $region48
      $region47: #{tpu_custom_call.1} parent=5 // pred_region
        %s884 = ssub.s32 %s16, 2
        // Predicated region
        $region49: #{tpu_custom_call.1} parent=47 // pred_check
          %p885 = pneg %p113
        $region50: #{tpu_custom_call.1} parent=47 // pred_check_branch
          %887 = sbr.rel (%p885) target = $region52
        $region51: #{tpu_custom_call.1} parent=47 // pred_region
          %s888 = sand.u32 %s98, 1
          %s889 = scalar_lea.sflag [#allocation4], %s888
          %s890 = sand.u32 %s98, 1
          %s891 = smul.addr %s890, 512
          %s892 = scalar_lea.vmem [#allocation7], %s891
          %893 = dma.done %s889, 8192
        $region52: #{tpu_custom_call.1} parent=47 // pred_fallthru
          _
      $region48: #{tpu_custom_call.1} parent=5 // pred_fallthru
        _
    $region6: #{tpu_custom_call.1} parent=1 // loop_footer
      %s20 = sadd.s32 1, %s16
    $region7: #{tpu_custom_call.1} parent=1 // loop_footer_branch
      %15 = sbr.rel target = $region3
    $region8: #{tpu_custom_call.1} parent=1 // loop_exit
      _
    %894 = vsyncpa [#allocation3], 1
    %s895 = scalar_lea.sflag [#allocation3], 1
    %896 = vsyncpa %s895, 1
    %897 = vsyncpa [#allocation6], 1
    %898 = vsyncpa [#allocation4], 1
    %s899 = scalar_lea.sflag [#allocation4], 1
    %900 = vsyncpa %s899, 1

</llo_original>
